<compile_context>
chip_gen: v6e
topology: v6e:2x2x1
jax: 0.10.0
libtpu: 0.0.40
codegen_flags: <defaults>
</compile_context>

<pallas_src>
import math

import jax
import jax.numpy as jnp
from jax import lax
from jax.experimental import pallas as pl
from jax.experimental.pallas import tpu as pltpu

_INV_SQRT2 = 0.7071067811865476


def _round_up(x, m):
    return ((x + m - 1) // m) * m


def _vmem_capacity_bytes():
    try:
        return int(pltpu.get_tpu_info().vmem_capacity_bytes)
    except Exception:
        return 128 * 1024 * 1024  # v5e/v6e physical VMEM if the query is unavailable


def _gelu_exact(h):
    # Exact (erf) GELU, matching torch.nn.GELU() defaults.
    return 0.5 * h * (1.0 + lax.erf(h * _INV_SQRT2))


def _mlp_head_kernel_tout(x_ref, w1_ref, b1_ref, w2_ref, b2_ref, ot_ref):
    """Row tile with tokens on the lane axis; output stored transposed (E, TM).

    x_ref: (TM, H)  w1_ref: (Hh, H)  b1_ref: (Hh, 1)  w2_ref: (E, Hh)
    b2_ref: (E, 1)  ot_ref: (E, TM)
    """
    x = x_ref[...]
    # h^T = W1 . x^T -> (Hh, TM): contract the last dims of both operands so the
    # token dim stays on the 128-wide lane axis (lane-dense bias add / GELU).
    h = lax.dot_general(w1_ref[...], x, (((1,), (1,)), ((), ())),
                        preferred_element_type=jnp.float32) + b1_ref[...]
    h = _gelu_exact(h)
    # out^T = W2 . h^T -> (E, TM); stored directly (no XLU transpose, unmasked vst).
    ot = jnp.dot(w2_ref[...], h.astype(w2_ref.dtype),
                 preferred_element_type=jnp.float32) + b2_ref[...]
    # TODO(synk): nn.Dropout is the eval-mode identity here; training-mode dropout
    # would need pltpu.prng_seed + pltpu.stateful_bernoulli and is intentionally omitted.
    ot_ref[...] = ot.astype(ot_ref.dtype)


def _mlp_head_kernel_rout(x_ref, w1_ref, b1_ref, w2_ref, b2_ref, o_ref):
    """Row tile stored row-major (TM, E); used when E >= 128 (already lane-dense).

    x_ref: (TM, H)  w1_ref: (Hh, H)  b1_ref: (1, Hh)  w2_ref: (E, Hh)
    b2_ref: (1, E)  o_ref: (TM, E)
    """
    x = x_ref[...]
    h = lax.dot_general(x, w1_ref[...], (((1,), (1,)), ((), ())),
                        preferred_element_type=jnp.float32) + b1_ref[...]
    h = _gelu_exact(h)
    out = lax.dot_general(h.astype(w2_ref.dtype), w2_ref[...], (((1,), (1,)), ((), ())),
                          preferred_element_type=jnp.float32) + b2_ref[...]
    o_ref[...] = out.astype(o_ref.dtype)


def instruction_trace_embedding_head(inputs, w1, b1, w2, b2, *, tm=1024):
    """inputs: (..., H).  w1: (H//2, H), b1: (H//2,), w2: (E, H//2), b2: (E,)."""
    *lead, H = inputs.shape
    Hh = w1.shape[0]
    E = w2.shape[0]

    x = inputs.reshape(-1, H)
    M = x.shape[0]
    itemsize = jnp.dtype(inputs.dtype).itemsize

    # Lane-dense output layout: if E < 128 emit (E, M) so the row tile sits on the
    # 128-lane store axis; the wrapper transposes back.  Otherwise store row-major.
    transposed_out = E < 128
    quantum = 128 if transposed_out else 8  # row-tile granularity for legal block shapes

    vmem_budget = int(0.85 * _vmem_capacity_bytes())

    def vmem_bytes(tile):
        # TODO(synk): pipeline_mode=pl.Buffered(1) on the grid-invariant weight specs
        # would halve the weight term once single-buffering is reliable on this path.
        return (2 * tile * (H + E) * itemsize                  # double-buffered x / out tiles
                + 3 * tile * max(Hh, E) * 4                    # live f32 intermediates
                + 2 * (Hh * H + E * Hh + Hh + E) * itemsize)   # resident weights / biases

    if M <= quantum:
        tm_eff = M  # single full-extent block (always a legal block shape)
    else:
        # >= 2 tiles so both v7x TensorCores get work, rebalanced so the final
        # partial block isn't mostly waste; then shrink to the per-gen VMEM budget.
        n_tiles = max(pl.cdiv(M, max(tm, quantum)), 2)
        tm_eff = _round_up(pl.cdiv(M, n_tiles), quantum)
        while tm_eff > quantum and vmem_bytes(tm_eff) > vmem_budget:
            tm_eff -= quantum

    grid = (pl.cdiv(M, tm_eff),)  # partial last block handled by Pallas (no jnp.pad)

    if transposed_out:
        kernel = _mlp_head_kernel_tout
        b1c, b2c = b1.reshape(Hh, 1), b2.reshape(E, 1)
        out_shape = jax.ShapeDtypeStruct((E, M), inputs.dtype)
        out_spec = pl.BlockSpec((E, tm_eff), lambda i: (0, i))
    else:
        kernel = _mlp_head_kernel_rout
        b1c, b2c = b1.reshape(1, Hh), b2.reshape(1, E)
        out_shape = jax.ShapeDtypeStruct((M, E), inputs.dtype)
        out_spec = pl.BlockSpec((tm_eff, E), lambda i: (i, 0))

    compiler_kwargs = dict(dimension_semantics=("parallel",))
    est = vmem_bytes(tm_eff)
    if est > 16 * 1024 * 1024:  # only raise above the smallest scoped default (v5e)
        compiler_kwargs["vmem_limit_bytes"] = int(min(vmem_budget, 2 * est))

    out = pl.pallas_call(
        kernel,
        out_shape=out_shape,
        grid_spec=pltpu.PrefetchScalarGridSpec(
            num_scalar_prefetch=0,
            grid=grid,
            in_specs=[
                pl.BlockSpec((tm_eff, H), lambda i: (i, 0)),   # x row tile (partial last block OK)
                pl.BlockSpec((Hh, H), lambda i: (0, 0)),       # W1 (grid-invariant resident)
                pl.BlockSpec(b1c.shape, lambda i: (0, 0)),     # b1
                pl.BlockSpec((E, Hh), lambda i: (0, 0)),       # W2
                pl.BlockSpec(b2c.shape, lambda i: (0, 0)),     # b2
            ],
            out_specs=out_spec,
        ),
        compiler_params=pltpu.CompilerParams(**compiler_kwargs),
    )(x, w1, b1c, w2, b2c)

    if transposed_out:
        out = out.T
    return out.reshape(*lead, E)


def _reference(inputs, w1, b1, w2, b2):
    h = inputs @ w1.T + b1
    h = _gelu_exact(h)
    return h @ w2.T + b2


if __name__ == "__main__":
    # Config: hidden_size=32 -> hidden_size//2=16, embedding_size=16.
    batch, seq, hidden, emb = 2, 8, 32, 16
    half = hidden // 2

    key = jax.random.PRNGKey(0)
    kx, kw1, kb1, kw2, kb2, kx2, kx3, kw3, kb3 = jax.random.split(key, 9)

    # nn.Linear-style uniform init, torch (out_features, in_features) layout.
    lim1 = 1.0 / math.sqrt(hidden)
    lim2 = 1.0 / math.sqrt(half)
    w1 = jax.random.uniform(kw1, (half, hidden), jnp.float32, -lim1, lim1)
    b1 = jax.random.uniform(kb1, (half,), jnp.float32, -lim1, lim1)
    w2 = jax.random.uniform(kw2, (emb, half), jnp.float32, -lim2, lim2)
    b2 = jax.random.uniform(kb2, (emb,), jnp.float32, -lim2, lim2)

    # 1) Base config (E=16 < 128 -> transposed lane-dense store path), M=16.
    inputs = jax.random.normal(kx, (batch, seq, hidden), dtype=jnp.float32)
    out = instruction_trace_embedding_head(inputs, w1, b1, w2, b2)
    jax.block_until_ready(out)
    assert out.shape == (batch, seq, emb)
    assert jnp.allclose(out, _reference(inputs, w1, b1, w2, b2), atol=2e-5, rtol=2e-5), \
        "mismatch (base path)"

    # 2) Non-divisible M (=15): partial last block instead of jnp.pad.
    inputs2 = jax.random.normal(kx2, (3, 5, hidden), dtype=jnp.float32)
    out2 = instruction_trace_embedding_head(inputs2, w1, b1, w2, b2)
    jax.block_until_ready(out2)
    assert out2.shape == (3, 5, emb)
    assert jnp.allclose(out2, _reference(inputs2, w1, b1, w2, b2), atol=2e-5, rtol=2e-5), \
        "mismatch (partial-block path)"

    # 3) Multi-tile + partial final tile (M=280 -> 2 grid steps).
    inputs3 = jax.random.normal(kx3, (4, 70, hidden), dtype=jnp.float32)
    out3 = instruction_trace_embedding_head(inputs3, w1, b1, w2, b2)
    jax.block_until_ready(out3)
    assert out3.shape == (4, 70, emb)
    assert jnp.allclose(out3, _reference(inputs3, w1, b1, w2, b2), atol=2e-5, rtol=2e-5), \
        "mismatch (multi-tile path)"

    # 4) Wide-embedding config (E=128 -> row-major store path, no transposes at all).
    emb_wide = 128
    w3 = jax.random.uniform(kw3, (emb_wide, half), jnp.float32, -lim2, lim2)
    b3 = jax.random.uniform(kb3, (emb_wide,), jnp.float32, -lim2, lim2)
    out4 = instruction_trace_embedding_head(inputs, w1, b1, w3, b3)
    jax.block_until_ready(out4)
    assert out4.shape == (batch, seq, emb_wide)
    assert jnp.allclose(out4, _reference(inputs, w1, b1, w3, b3), atol=2e-5, rtol=2e-5), \
        "mismatch (row-major path)"

    # 5) bf16 activations/weights (halves HBM bytes on this HBM-bound head); f32 accumulation.
    bf = jnp.bfloat16
    out5 = instruction_trace_embedding_head(
        inputs.astype(bf), w1.astype(bf), b1.astype(bf), w2.astype(bf), b2.astype(bf))
    jax.block_until_ready(out5)
    ref5 = _reference(inputs.astype(bf).astype(jnp.float32),
                      w1.astype(bf).astype(jnp.float32), b1.astype(bf).astype(jnp.float32),
                      w2.astype(bf).astype(jnp.float32), b2.astype(bf).astype(jnp.float32))
    assert out5.dtype == bf and out5.shape == (batch, seq, emb)
    assert jnp.allclose(out5.astype(jnp.float32), ref5, atol=5e-2, rtol=5e-2), \
        "mismatch (bf16 path)"

    print("KERNEL_OK")
</pallas_src>

<mosaic_0001>
module attributes {stable_mosaic.version = 11 : i64} {
  func.func @_mlp_head_kernel_tout(%arg0: i32, %arg1: memref<16x32xf32, #tpu.memory_space<vmem>>, %arg2: memref<16x32xf32, #tpu.memory_space<vmem>>, %arg3: memref<16x1xf32, #tpu.memory_space<vmem>>, %arg4: memref<16x16xf32, #tpu.memory_space<vmem>>, %arg5: memref<16x1xf32, #tpu.memory_space<vmem>>, %arg6: memref<16x16xf32, #tpu.memory_space<vmem>>) attributes {dimension_semantics = [#tpu.dimension_semantics<parallel>], iteration_bounds = array<i64: 1>, scalar_prefetch = 0 : i64, scratch_operands = 0 : i64, tpu.core_type = #tpu.core_type<tc>, window_params = [{transform_indices = @transform_0, window_bounds = array<i64: 16, 32>}, {pipeline_mode = #tpu.pipeline_mode<synchronous>, transform_indices = @transform_1, window_bounds = array<i64: 16, 32>}, {pipeline_mode = #tpu.pipeline_mode<synchronous>, transform_indices = @transform_2, window_bounds = array<i64: 16, 1>}, {pipeline_mode = #tpu.pipeline_mode<synchronous>, transform_indices = @transform_3, window_bounds = array<i64: 16, 16>}, {pipeline_mode = #tpu.pipeline_mode<synchronous>, transform_indices = @transform_4, window_bounds = array<i64: 16, 1>}, {transform_indices = @transform_5, window_bounds = array<i64: 16, 16>}]} {
    %c0 = arith.constant 0 : index
    %c0_0 = arith.constant 0 : index
    %0 = vector.load %arg1[%c0, %c0_0] : memref<16x32xf32, #tpu.memory_space<vmem>>, vector<16x32xf32>
    %c0_1 = arith.constant 0 : index
    %c0_2 = arith.constant 0 : index
    %1 = vector.load %arg2[%c0_1, %c0_2] : memref<16x32xf32, #tpu.memory_space<vmem>>, vector<16x32xf32>
    %cst = arith.constant dense<0.000000e+00> : vector<16x16xf32>
    %2 = tpu.matmul %1, %0, %cst {dimension_numbers = #tpu.dot_dimension_numbers<[1], [1], [0], [0], [0, 0, 1, 0], [], []>} : vector<16x32xf32>, vector<16x32xf32>, vector<16x16xf32> -> vector<16x16xf32>
    %c0_3 = arith.constant 0 : index
    %c0_4 = arith.constant 0 : index
    %3 = vector.load %arg3[%c0_3, %c0_4] : memref<16x1xf32, #tpu.memory_space<vmem>>, vector<16x1xf32>
    %4 = vector.broadcast %3 : vector<16x1xf32> to vector<16x16xf32>
    %5 = arith.addf %2, %4 : vector<16x16xf32>
    %cst_5 = arith.constant 5.000000e-01 : f32
    %6 = vector.broadcast %cst_5 : f32 to vector<16x16xf32>
    %7 = arith.mulf %6, %5 : vector<16x16xf32>
    %cst_6 = arith.constant 0.707106769 : f32
    %8 = vector.broadcast %cst_6 : f32 to vector<16x16xf32>
    %9 = arith.mulf %5, %8 : vector<16x16xf32>
    %10 = math.erf %9 : vector<16x16xf32>
    %cst_7 = arith.constant 1.000000e+00 : f32
    %11 = vector.broadcast %cst_7 : f32 to vector<16x16xf32>
    %12 = arith.addf %11, %10 : vector<16x16xf32>
    %13 = arith.mulf %7, %12 : vector<16x16xf32>
    %c0_8 = arith.constant 0 : index
    %c0_9 = arith.constant 0 : index
    %14 = vector.load %arg4[%c0_8, %c0_9] : memref<16x16xf32, #tpu.memory_space<vmem>>, vector<16x16xf32>
    %cst_10 = arith.constant dense<0.000000e+00> : vector<16x16xf32>
    %15 = tpu.matmul %14, %13, %cst_10 {dimension_numbers = #tpu.dot_dimension_numbers<[1], [0], [0], [1], [0, 0, 1, 1], [], []>} : vector<16x16xf32>, vector<16x16xf32>, vector<16x16xf32> -> vector<16x16xf32>
    %c0_11 = arith.constant 0 : index
    %c0_12 = arith.constant 0 : index
    %16 = vector.load %arg5[%c0_11, %c0_12] : memref<16x1xf32, #tpu.memory_space<vmem>>, vector<16x1xf32>
    %17 = vector.broadcast %16 : vector<16x1xf32> to vector<16x16xf32>
    %18 = arith.addf %15, %17 : vector<16x16xf32>
    %c0_13 = arith.constant 0 : index
    %c0_14 = arith.constant 0 : index
    %19 = vector.load %arg6[%c0_13, %c0_14] : memref<16x16xf32, #tpu.memory_space<vmem>>, vector<16x16xf32>
    tpu.vector_store %arg6[%c0_13, %c0_14], %18 {strides = array<i32>} : memref<16x16xf32, #tpu.memory_space<vmem>>, vector<16x16xf32>,
    return
  }
  func.func @transform_0(%arg0: i32) -> (i32, i32) {
    %c0_i32 = arith.constant 0 : i32
    %c0_i32_0 = arith.constant 0 : i32
    return %arg0, %c0_i32 : i32, i32
  }
  func.func @transform_1(%arg0: i32) -> (i32, i32) {
    %c0_i32 = arith.constant 0 : i32
    %c0_i32_0 = arith.constant 0 : i32
    %c0_i32_1 = arith.constant 0 : i32
    return %c0_i32, %c0_i32_0 : i32, i32
  }
  func.func @transform_2(%arg0: i32) -> (i32, i32) {
    %c0_i32 = arith.constant 0 : i32
    %c0_i32_0 = arith.constant 0 : i32
    %c0_i32_1 = arith.constant 0 : i32
    return %c0_i32, %c0_i32_0 : i32, i32
  }
  func.func @transform_3(%arg0: i32) -> (i32, i32) {
    %c0_i32 = arith.constant 0 : i32
    %c0_i32_0 = arith.constant 0 : i32
    %c0_i32_1 = arith.constant 0 : i32
    return %c0_i32, %c0_i32_0 : i32, i32
  }
  func.func @transform_4(%arg0: i32) -> (i32, i32) {
    %c0_i32 = arith.constant 0 : i32
    %c0_i32_0 = arith.constant 0 : i32
    %c0_i32_1 = arith.constant 0 : i32
    return %c0_i32, %c0_i32_0 : i32, i32
  }
  func.func @transform_5(%arg0: i32) -> (i32, i32) {
    %c0_i32 = arith.constant 0 : i32
    %c0_i32_0 = arith.constant 0 : i32
    return %c0_i32, %arg0 : i32, i32
  }
}

</mosaic_0001>

<llo_original>
// kernel: tpu_custom_call.1
$region0: #{tpu_custom_call.1}
  #allocation0 [shape = 'u32[]', space=smem, size = 0x4, offset = 0x4, fixed_abs, tag = 'smem constant byte address 0x4 - core index']
  #allocation1 [shape = 'u32[144,128]{1,0:T(1,128)}', space=vmem, size = 0x12000, scoped, tag = 'internal scratch']
  %s0 = inlined_call_operand.vmem [shape: f32[16,32], index: 0, kind: input, shape index: {}]
  %s1 = inlined_call_operand.vmem [shape: f32[16,32], index: 1, kind: input, shape index: {}]
  %s2 = inlined_call_operand.vmem [shape: f32[16,1], index: 2, kind: input, shape index: {}]
  %s3 = inlined_call_operand.hbm [shape: f32[16,16], index: 3, kind: input, shape index: {}]
  %s4 = inlined_call_operand.vmem [shape: f32[16,1], index: 4, kind: input, shape index: {}]
  %s5 = inlined_call_operand.hbm [shape: f32[16,16], index: 5, kind: output, shape index: {}]
  %s6 = sld [smem:[#allocation0]]
  $region34: #{tpu_custom_call.1} parent=0
    _
  %s8 = ssub.s32 1, %s6
  %s9 = scalar_select 0, %s8, %s6
  $region1: #{tpu_custom_call.1} parent=0
    #allocation2 [shape = 'u8[8192]{0}', space=vmem, size = 0x2000, scoped, tag = 'input window, operand 3, single buffered']
    #allocation3 [shape = 's32[1]{0}', space=sflag, size = 0x4, scoped, tag = 'scoped memory for tpu_custom_call.1']
    #allocation4 [shape = 's32[1]{0}', space=sflag, size = 0x4, scoped, tag = 'scoped memory for tpu_custom_call.1']
    #allocation5 [shape = 'u8[8192]{0}', space=vmem, size = 0x2000, scoped, tag = 'output window, operand 0, single buffered']
    %10 = vsyncpa [#allocation3], 0
    %11 = vsyncpa [#allocation4], 0
    // Predicated region
    $region2: #{tpu_custom_call.1} parent=1 // pred_check
      _
    $region3: #{tpu_custom_call.1} parent=1 // pred_check_branch
      %13 = sbr.rel (0) target = $region5
    $region4: #{tpu_custom_call.1} parent=1 // pred_region
      _
    $region5: #{tpu_custom_call.1} parent=1 // pred_fallthru
      _
    // Predicated region
    $region6: #{tpu_custom_call.1} parent=1 // pred_check
      _
    $region7: #{tpu_custom_call.1} parent=1 // pred_check_branch
      %15 = sbr.rel (0) target = $region9
    $region8: #{tpu_custom_call.1} parent=1 // pred_region
      _
    $region9: #{tpu_custom_call.1} parent=1 // pred_fallthru
      _
    // Predicated region
    $region10: #{tpu_custom_call.1} parent=1 // pred_check
      _
    $region11: #{tpu_custom_call.1} parent=1 // pred_check_branch
      %17 = sbr.rel (0) target = $region13
    $region12: #{tpu_custom_call.1} parent=1 // pred_region
      _
    $region13: #{tpu_custom_call.1} parent=1 // pred_fallthru
      _
    // Predicated region
    $region14: #{tpu_custom_call.1} parent=1 // pred_check
      _
    $region15: #{tpu_custom_call.1} parent=1 // pred_check_branch
      %19 = sbr.rel (0) target = $region17
    $region16: #{tpu_custom_call.1} parent=1 // pred_region
      %s21 = ssub.s32 256, 256
      %22 = vsyncadd [#allocation3], %s21
      %s23 = sshll.u32 [#allocation2], 4
      %s24 = int_to_ptr.vmem [resolvable:$true] %s23
      %29 = dma.hbm_to_vmem [thread:$0]  %s3, 256, %s24, [#allocation3], 128, 128, 8
    $region17: #{tpu_custom_call.1} parent=1 // pred_fallthru
      _
    // Predicated region
    $region18: #{tpu_custom_call.1} parent=1 // pred_check
      _
    $region19: #{tpu_custom_call.1} parent=1 // pred_check_branch
      %31 = sbr.rel (0) target = $region21
    $region20: #{tpu_custom_call.1} parent=1 // pred_region
      _
    $region21: #{tpu_custom_call.1} parent=1 // pred_fallthru
      _
    // Predicated region
    $region22: #{tpu_custom_call.1} parent=1 // pred_check
      _
    $region23: #{tpu_custom_call.1} parent=1 // pred_check_branch
      %33 = sbr.rel (0) target = $region25
    $region24: #{tpu_custom_call.1} parent=1 // pred_region
      %34 = dma.done [#allocation3], 256
    $region25: #{tpu_custom_call.1} parent=1 // pred_fallthru
      _
    %v35 = vld [vmem:[%s0] sm:$0xff]
    %v36 = vld [vmem:[%s0 + $0x8] sm:$0xff]
    %v37 = vld [vmem:[%s1] sm:$0xff]
    %v38 = vld [vmem:[%s1 + $0x8] sm:$0xff]
    %v39 = vld [vmem:[%s2] sm:$0xff]
    %v40 = vld [vmem:[%s2 + $0x8] sm:$0xff]
    %42 = vset.pattern.permute.xlu0 0
    %43 = vperm.xlu0 %42, %v39
    %v44 = vpop.permute.xlu0 %43
    %47 = vset.pattern.permute.xlu0 0
    %48 = vperm.xlu0 %47, %v40
    %v49 = vpop.permute.xlu0 %48
    %vm51 = vcmask 261120
    %v53 = vsel %vm51, %v37, 0
    %v56 = vsel %vm51, %v38, 0
    %v59 = vsel %vm51, %v35, 0
    %v62 = vsel %vm51, %v36, 0
    %64 = vmatprep.subr.mxu0 0.0
    %65 = vmatpush1.xpose.msra.mxu0 0.0
    %66 = vmatprep.subr.mxu0 0.0
    %67 = vmatpush1.xpose.msra.mxu0 0.0
    %68 = vmatprep.subr.mxu0 0.0
    %69 = vmatpush1.xpose.msra.mxu0 0.0
    %70 = vmatprep.subr.mxu0 0.0
    %71 = vmatpush1.xpose.msra.mxu0 0.0
    %72 = vmatprep.subr.mxu0 0.0
    %73 = vmatpush1.xpose.msra.mxu0 0.0
    %74 = vmatprep.subr.mxu0 0.0
    %75 = vmatpush1.xpose.msra.mxu0 0.0
    %76 = vmatprep.subr.mxu0 0.0
    %77 = vmatpush1.xpose.msra.mxu0 0.0
    %78 = vmatprep.subr.mxu0 0.0
    %79 = vmatpush1.xpose.msra.mxu0 0.0
    %80 = vmatprep.subr.mxu0 0.0
    %81 = vmatpush1.xpose.msra.mxu0 0.0
    %82 = vmatprep.subr.mxu0 0.0
    %83 = vmatpush1.xpose.msra.mxu0 0.0
    %84 = vmatprep.subr.mxu0 0.0
    %85 = vmatpush1.xpose.msra.mxu0 0.0
    %86 = vmatprep.subr.mxu0 0.0
    %87 = vmatpush1.xpose.msra.mxu0 0.0
    %88 = vmatprep.subr.mxu0 0.0
    %89 = vmatpush1.xpose.msra.mxu0 0.0
    %90 = vmatprep.subr.mxu0 0.0
    %91 = vmatpush1.xpose.msra.mxu0 0.0
    %92 = vmatprep.subr.mxu0 0.0
    %93 = vmatpush1.xpose.msra.mxu0 %v62
    %94 = vmatprep.subr.mxu0 0.0
    %95 = vmatpush1.xpose.msra.mxu0 %v59
    %96 = vmatprep.subr.mxu0 0.0
    %97 = vmatpush2.xpose.msra.mxu0 0.0
    %98 = vmatprep.subr.mxu0 0.0
    %99 = vmatpush2.xpose.msra.mxu0 0.0
    %100 = vmatprep.subr.mxu0 0.0
    %101 = vmatpush2.xpose.msra.mxu0 0.0
    %102 = vmatprep.subr.mxu0 0.0
    %103 = vmatpush2.xpose.msra.mxu0 0.0
    %104 = vmatprep.subr.mxu0 0.0
    %105 = vmatpush2.xpose.msra.mxu0 0.0
    %106 = vmatprep.subr.mxu0 0.0
    %107 = vmatpush2.xpose.msra.mxu0 0.0
    %108 = vmatprep.subr.mxu0 0.0
    %109 = vmatpush2.xpose.msra.mxu0 0.0
    %110 = vmatprep.subr.mxu0 0.0
    %111 = vmatpush2.xpose.msra.mxu0 0.0
    %112 = vmatprep.subr.mxu0 0.0
    %113 = vmatpush2.xpose.msra.mxu0 0.0
    %114 = vmatprep.subr.mxu0 0.0
    %115 = vmatpush2.xpose.msra.mxu0 0.0
    %116 = vmatprep.subr.mxu0 0.0
    %117 = vmatpush2.xpose.msra.mxu0 0.0
    %118 = vmatprep.subr.mxu0 0.0
    %119 = vmatpush2.xpose.msra.mxu0 0.0
    %120 = vmatprep.subr.mxu0 0.0
    %121 = vmatpush2.xpose.msra.mxu0 0.0
    %122 = vmatprep.subr.mxu0 0.0
    %123 = vmatpush2.xpose.msra.mxu0 0.0
    %124 = vmatprep.subr.mxu0 0.0
    %125 = vmatpush2.xpose.msra.mxu0 0.0
    %126 = vmatprep.subr.mxu0 0.0
    %127 = vmatpush2.xpose.msra.mxu0 0.0
    %128 = vmatprep.mubr.f32.mxu0 0.0
    %129 = vmatmul.mubr.f32.gmra.mxu0 %v53
    %v130 = vpop.f32.mrf.mxu0
    %v131 = vadd.f32 %v44, %v130
    %v132 = vpop.f32.mrf.mxu0
    %133 = vmatprep.mubr.f32.mxu0 0.0
    %134 = vmatmul.mubr.f32.gmra.mxu0 %v56
    %v135 = vpop.f32.mrf.mxu0
    %v136 = vadd.f32 %v49, %v135
    %v137 = vpop.f32.mrf.mxu0
    %138 = vdwg.mxu0
    %v139 = vmul.f32 %v131, 0.5
    %v140 = vmul.f32 %v136, 0.5
    %v141 = vmul.f32 %v131, 0.70710677
    %v142 = vmul.f32 %v136, 0.70710677
    %v143 = verf.f32.pop %v141
    %v144 = verf.f32.pop %v142
    %v145 = vadd.f32 %v143, 1.0
    %v146 = vadd.f32 %v144, 1.0
    %v147 = vmul.f32 %v139, %v145
    %v148 = vmul.f32 %v140, %v146
    %v149 = vld [vmem:[#allocation2] sm:$0xff]
    %v150 = vld [vmem:[#allocation2 + $0x8] sm:$0xff]
    %v151 = vld [vmem:[%s4] sm:$0xff]
    %v152 = vld [vmem:[%s4 + $0x8] sm:$0xff]
    %154 = vset.pattern.permute.xlu0 0
    %155 = vperm.xlu0 %154, %v151
    %v156 = vpop.permute.xlu0 %155
    %159 = vset.pattern.permute.xlu0 0
    %160 = vperm.xlu0 %159, %v152
    %v161 = vpop.permute.xlu0 %160
    %vm163 = vcmask 130048
    %v165 = vsel %vm163, %v149, 0
    %v168 = vsel %vm163, %v150, 0
    %170 = vmatprep.subr.mxu0 0.0
    %171 = vmatpush1.msra.mxu0 0.0
    %172 = vmatprep.subr.mxu0 0.0
    %173 = vmatpush1.msra.mxu0 0.0
    %174 = vmatprep.subr.mxu0 0.0
    %175 = vmatpush1.msra.mxu0 0.0
    %176 = vmatprep.subr.mxu0 0.0
    %177 = vmatpush1.msra.mxu0 0.0
    %178 = vmatprep.subr.mxu0 0.0
    %179 = vmatpush1.msra.mxu0 0.0
    %180 = vmatprep.subr.mxu0 0.0
    %181 = vmatpush1.msra.mxu0 0.0
    %182 = vmatprep.subr.mxu0 0.0
    %183 = vmatpush1.msra.mxu0 0.0
    %184 = vmatprep.subr.mxu0 0.0
    %185 = vmatpush1.msra.mxu0 0.0
    %186 = vmatprep.subr.mxu0 0.0
    %187 = vmatpush1.msra.mxu0 0.0
    %188 = vmatprep.subr.mxu0 0.0
    %189 = vmatpush1.msra.mxu0 0.0
    %190 = vmatprep.subr.mxu0 0.0
    %191 = vmatpush1.msra.mxu0 0.0
    %192 = vmatprep.subr.mxu0 0.0
    %193 = vmatpush1.msra.mxu0 0.0
    %194 = vmatprep.subr.mxu0 0.0
    %195 = vmatpush1.msra.mxu0 0.0
    %196 = vmatprep.subr.mxu0 0.0
    %197 = vmatpush1.msra.mxu0 0.0
    %198 = vmatprep.subr.mxu0 0.0
    %199 = vmatpush1.msra.mxu0 %v148
    %200 = vmatprep.subr.mxu0 0.0
    %201 = vmatpush1.msra.mxu0 %v147
    %202 = vmatprep.subr.mxu0 0.0
    %203 = vmatpush2.msra.mxu0 0.0
    %204 = vmatprep.subr.mxu0 0.0
    %205 = vmatpush2.msra.mxu0 0.0
    %206 = vmatprep.subr.mxu0 0.0
    %207 = vmatpush2.msra.mxu0 0.0
    %208 = vmatprep.subr.mxu0 0.0
    %209 = vmatpush2.msra.mxu0 0.0
    %210 = vmatprep.subr.mxu0 0.0
    %211 = vmatpush2.msra.mxu0 0.0
    %212 = vmatprep.subr.mxu0 0.0
    %213 = vmatpush2.msra.mxu0 0.0
    %214 = vmatprep.subr.mxu0 0.0
    %215 = vmatpush2.msra.mxu0 0.0
    %216 = vmatprep.subr.mxu0 0.0
    %217 = vmatpush2.msra.mxu0 0.0
    %218 = vmatprep.subr.mxu0 0.0
    %219 = vmatpush2.msra.mxu0 0.0
    %220 = vmatprep.subr.mxu0 0.0
    %221 = vmatpush2.msra.mxu0 0.0
    %222 = vmatprep.subr.mxu0 0.0
    %223 = vmatpush2.msra.mxu0 0.0
    %224 = vmatprep.subr.mxu0 0.0
    %225 = vmatpush2.msra.mxu0 0.0
    %226 = vmatprep.subr.mxu0 0.0
    %227 = vmatpush2.msra.mxu0 0.0
    %228 = vmatprep.subr.mxu0 0.0
    %229 = vmatpush2.msra.mxu0 0.0
    %230 = vmatprep.subr.mxu0 0.0
    %231 = vmatpush2.msra.mxu0 0.0
    %232 = vmatprep.subr.mxu0 0.0
    %233 = vmatpush2.msra.mxu0 0.0
    %234 = vmatprep.mubr.f32.mxu0 0.0
    %235 = vmatmul.mubr.f32.gmra.mxu0 %v165
    %v236 = vpop.f32.mrf.mxu0
    %v237 = vadd.f32 %v156, %v236
    %v238 = vpop.f32.mrf.mxu0
    %239 = vmatprep.mubr.f32.mxu0 0.0
    %240 = vmatmul.mubr.f32.gmra.mxu0 %v168
    %v241 = vpop.f32.mrf.mxu0
    %v242 = vadd.f32 %v161, %v241
    %v243 = vpop.f32.mrf.mxu0
    %244 = vdwg.mxu0
    %245 = vst.msk [vmem:[#allocation5] sm:$0xff] %vm163, %v237
    %246 = vst.msk [vmem:[#allocation5 + $0x8] sm:$0xff] %vm163, %v242
    // Predicated region
    $region26: #{tpu_custom_call.1} parent=1 // pred_check
      _
    $region27: #{tpu_custom_call.1} parent=1 // pred_check_branch
      %248 = sbr.rel (0) target = $region29
    $region28: #{tpu_custom_call.1} parent=1 // pred_region
      %s250 = ssub.s32 256, 256
      %251 = vsyncadd [#allocation4], %s250
      %s252 = sshll.u32 [#allocation5], 4
      %s253 = int_to_ptr.vmem [resolvable:$true] %s252
      %258 = dma.vmem_to_hbm [thread:$0]  %s253, 256, %s5, [#allocation4], 128, 128, 8
    $region29: #{tpu_custom_call.1} parent=1 // pred_fallthru
      _
    // Predicated region
    $region30: #{tpu_custom_call.1} parent=1 // pred_check
      _
    $region31: #{tpu_custom_call.1} parent=1 // pred_check_branch
      %260 = sbr.rel (0) target = $region33
    $region32: #{tpu_custom_call.1} parent=1 // pred_region
      %261 = dma.done [#allocation4], 256
    $region33: #{tpu_custom_call.1} parent=1 // pred_fallthru
      _
    %262 = vsyncpa [#allocation3], 1
    %263 = vsyncpa [#allocation4], 1

</llo_original>
